<compile_context>
chip_gen: v7x
topology: tpu7x:2x2x1
jax: 0.10.0
libtpu: 0.0.40
codegen_flags: <defaults>
</compile_context>

<pallas_src>
import functools

import jax
import jax.numpy as jnp
import numpy as np
from jax.experimental import pallas as pl
from jax.experimental.pallas import tpu as pltpu

_BIG = 2 ** 30  # sentinel index, larger than any real anchor/gt index


def _round_up(x, m):
    return ((x + m - 1) // m) * m


def _iou_tile(anchor_ref, gt_ref):
    """IoU in (M_pad, TN) orientation: gts on sublanes, anchors on lanes."""
    ax1 = anchor_ref[0:1, :]          # (1, TN)
    ay1 = anchor_ref[1:2, :]
    ax2 = anchor_ref[2:3, :]
    ay2 = anchor_ref[3:4, :]
    gx1 = gt_ref[:, 0:1]              # (M_pad, 1)
    gy1 = gt_ref[:, 1:2]
    gx2 = gt_ref[:, 2:3]
    gy2 = gt_ref[:, 3:4]
    area_a = (ax2 - ax1) * (ay2 - ay1)      # (1, TN)
    area_g = (gx2 - gx1) * (gy2 - gy1)      # (M_pad, 1)
    iw = jnp.maximum(jnp.minimum(ax2, gx2) - jnp.maximum(ax1, gx1), 0.0)  # (M_pad, TN)
    ih = jnp.maximum(jnp.minimum(ay2, gy2) - jnp.maximum(ay1, gy1), 0.0)
    inter = iw * ih
    # Exact f32 divide kept on purpose: an approximate EUP reciprocal could flip
    # results sitting exactly at the pos/neg thresholds or in argmax near-ties.
    return inter / (area_a + area_g - inter)


def _pass1_kernel(anchor_ref, gt_ref, part_ref, colarg_ref, colmax_ref, *,
                  pos_thresh, neg_thresh, tile_n, n_valid, m_valid,
                  mask_anchor, mask_gt):
    i = pl.program_id(0)

    @pl.when(i == 0)
    def _init():
        colmax_ref[...] = jnp.full(colmax_ref.shape, -jnp.inf, jnp.float32)
        colarg_ref[...] = jnp.full(colarg_ref.shape, _BIG, jnp.int32)

    iou = _iou_tile(anchor_ref, gt_ref)              # (M_pad, TN)
    m_pad, tn = iou.shape

    lane = jax.lax.broadcasted_iota(jnp.int32, (1, tn), 1)
    anchor_idx = lane + i * tile_n                   # global anchor index, (1, TN)
    gt_idx = jax.lax.broadcasted_iota(jnp.int32, (m_pad, 1), 0)

    neg_inf = jnp.float32(-jnp.inf)
    if mask_anchor:   # padded anchors must never win any reduction
        iou = jnp.where(anchor_idx < n_valid, iou, neg_inf)
    if mask_gt:       # padded gts must never win any reduction
        iou = jnp.where(gt_idx < m_valid, iou, neg_inf)

    # --- per-anchor stats (reduce over gt sublanes) -> thresholded assignment.
    amax = jnp.max(iou, axis=0, keepdims=True)                                # (1, TN)
    aarg = jnp.min(jnp.where(iou == amax, gt_idx, _BIG), axis=0, keepdims=True)
    part = jnp.full((1, tn), -2, jnp.int32)
    part = jnp.where(amax > pos_thresh, aarg, part)
    part = jnp.where(amax < neg_thresh, jnp.int32(-1), part)
    part_ref[...] = part                                                      # lane-dense store

    # --- per-gt stats (reduce over anchor lanes), accumulated across tiles.
    #     Strict '>' keeps first-occurrence tie-break across tiles; the in-tile
    #     jnp.min keeps it within a tile.
    gmax = jnp.max(iou, axis=1, keepdims=True)                                # (M_pad, 1)
    garg = jnp.min(jnp.where(iou == gmax, anchor_idx, _BIG), axis=1, keepdims=True)
    upd = gmax > colmax_ref[...]
    colmax_ref[...] = jnp.where(upd, gmax, colmax_ref[...])
    colarg_ref[...] = jnp.where(upd, garg, colarg_ref[...])


def _pass2_kernel(part_ref, colarg_ref, out_ref, *, tile_n):
    i = pl.program_id(0)
    m_pad = colarg_ref.shape[0]
    tn = part_ref.shape[1]
    lane = jax.lax.broadcasted_iota(jnp.int32, (1, tn), 1)
    anchor_idx = lane + i * tile_n                                            # (1, TN)
    gt_idx = jax.lax.broadcasted_iota(jnp.int32, (m_pad, 1), 0)
    # Forced positives: largest gt id whose globally-best anchor is this anchor
    # (equivalent to the sequential overwrite loop where later gt ids win).
    # Padded gts carry the _BIG sentinel and can never be picked.
    picked = colarg_ref[...] == anchor_idx                                    # (M_pad, TN)
    forced = jnp.max(jnp.where(picked, gt_idx, jnp.int32(-1)),
                     axis=0, keepdims=True)                                   # (1, TN)
    out_ref[...] = jnp.where(forced >= 0, forced, part_ref[...])


def stander_assign(anchor, gt, pos_thresh=0.5, neg_thresh=0.3, tile_n=2048):
    """anchor: [N,4] f32, gt: [M,4] f32 -> [N] int32 assignment."""
    anchor = jnp.asarray(anchor, jnp.float32)
    gt = jnp.asarray(gt, jnp.float32)
    n = int(anchor.shape[0])
    m = int(gt.shape[0])

    # Tile the anchor (lane) axis.  Per-tile working set is ~ a few copies of
    # (M_pad, TN) f32 -> ~3 MiB at TN=2048, M_pad=64, well inside the scoped
    # VMEM of v5e (16 MiB), v6e (32 MiB) and v7x (32 MiB) with double-buffering.
    tn = min(_round_up(int(tile_n), 128), _round_up(n, 128))
    n_pad = _round_up(n, tn)
    m_pad = max(_round_up(m, 8), 8)
    num_tiles = n_pad // tn

    anchor_t = jnp.pad(anchor.T, ((0, 0), (0, n_pad - n)))    # [4, N_pad]
    gt_p = jnp.pad(gt, ((0, m_pad - m), (0, 0)))              # [M_pad, 4]

    # Pass 1: thresholded per-anchor assignment (lane-dense output) + global
    # per-gt argmax accumulated across the N-tile grid (resident tiny output).
    k1 = functools.partial(
        _pass1_kernel, pos_thresh=float(pos_thresh), neg_thresh=float(neg_thresh),
        tile_n=tn, n_valid=n, m_valid=m,
        mask_anchor=(n_pad != n), mask_gt=(m_pad != m))
    part, colarg = pl.pallas_call(
        k1,
        out_shape=(jax.ShapeDtypeStruct((1, n_pad), jnp.int32),
                   jax.ShapeDtypeStruct((m_pad, 1), jnp.int32)),
        grid_spec=pltpu.PrefetchScalarGridSpec(
            num_scalar_prefetch=0,
            grid=(num_tiles,),
            in_specs=[pl.BlockSpec((4, tn), lambda i: (0, i)),
                      pl.BlockSpec((m_pad, 4), lambda i: (0, 0))],
            out_specs=(pl.BlockSpec((1, tn), lambda i: (0, i)),
                       pl.BlockSpec((m_pad, 1), lambda i: (0, 0))),
            scratch_shapes=[pltpu.VMEM((m_pad, 1), jnp.float32)]),
        compiler_params=pltpu.CompilerParams(
            dimension_semantics=("arbitrary",)),   # cross-tile accumulator
    )(anchor_t, gt_p)

    # Pass 2: apply the forced gt->anchor matches (needs the *final* per-gt
    # argmax, hence a second, very light pass; fully parallel over tiles).
    k2 = functools.partial(_pass2_kernel, tile_n=tn)
    assign = pl.pallas_call(
        k2,
        out_shape=jax.ShapeDtypeStruct((1, n_pad), jnp.int32),
        grid_spec=pltpu.PrefetchScalarGridSpec(
            num_scalar_prefetch=0,
            grid=(num_tiles,),
            in_specs=[pl.BlockSpec((1, tn), lambda i: (0, i)),
                      pl.BlockSpec((m_pad, 1), lambda i: (0, 0))],
            out_specs=pl.BlockSpec((1, tn), lambda i: (0, i))),
        compiler_params=pltpu.CompilerParams(
            dimension_semantics=("parallel",)),
    )(part, colarg)

    return assign[0, :n]


def _reference_assign(anchor, gt, pos_thresh=0.5, neg_thresh=0.3):
    """NumPy re-implementation mirroring the PyTorch forward, for validation."""
    anchor = np.asarray(anchor, dtype=np.float64)
    gt = np.asarray(gt, dtype=np.float64)
    N = anchor.shape[0]
    area_a = (anchor[:, 2] - anchor[:, 0]) * (anchor[:, 3] - anchor[:, 1])
    area_g = (gt[:, 2] - gt[:, 0]) * (gt[:, 3] - gt[:, 1])
    iw = np.maximum(
        np.minimum(anchor[:, None, 2], gt[None, :, 2])
        - np.maximum(anchor[:, None, 0], gt[None, :, 0]), 0.0)
    ih = np.maximum(
        np.minimum(anchor[:, None, 3], gt[None, :, 3])
        - np.maximum(anchor[:, None, 1], gt[None, :, 1]), 0.0)
    inter = iw * ih
    iou = inter / (area_a[:, None] + area_g[None, :] - inter)

    max_iou = iou.max(axis=1)
    max_idx = iou.argmax(axis=1)
    assign = np.full(N, -2, dtype=np.int64)
    pos_m = max_iou > pos_thresh
    assign[pos_m] = max_idx[pos_m]
    assign[max_iou < neg_thresh] = -1
    col_idx = iou.argmax(axis=0)
    for gt_id, anchor_id in enumerate(col_idx):
        assign[anchor_id] = gt_id
    return assign


if __name__ == "__main__":
    root = jax.random.PRNGKey(0)

    def make_boxes(k, n):
        kxy, kwh = jax.random.split(k)
        xy = jax.random.uniform(kxy, (n, 2), minval=0.0, maxval=10.0)
        wh = jax.random.uniform(kwh, (n, 2), minval=0.5, maxval=5.5)
        return jnp.concatenate([xy, xy + wh], axis=1).astype(jnp.float32)

    # (N anchors, M gts, tile_n).  The second case exercises anchor/gt padding
    # and the multi-tile cross-grid per-gt argmax reduction.
    cases = [(64, 8, 2048), (300, 5, 128)]
    for idx, (N, M, tile) in enumerate(cases):
        ka, kg = jax.random.split(jax.random.fold_in(root, idx))
        anchor = make_boxes(ka, N)
        gt = make_boxes(kg, M)
        out = jax.block_until_ready(
            stander_assign(anchor, gt, 0.5, 0.3, tile_n=tile))
        ref = _reference_assign(np.asarray(anchor), np.asarray(gt), 0.5, 0.3)
        assert np.array_equal(np.asarray(out, dtype=np.int64), ref), (N, M, out, ref)

    print("KERNEL_OK")
</pallas_src>

<mosaic_0001>
module attributes {stable_mosaic.version = 11 : i64} {
  func.func @_pass1_kernel(%arg0: i32, %arg1: memref<4x128xf32, #tpu.memory_space<vmem>>, %arg2: memref<8x4xf32, #tpu.memory_space<vmem>>, %arg3: memref<1x128xi32, #tpu.memory_space<vmem>>, %arg4: memref<8x1xi32, #tpu.memory_space<vmem>>, %arg5: memref<8x1xf32, #tpu.memory_space<vmem>>) attributes {dimension_semantics = [#tpu.dimension_semantics<arbitrary>], iteration_bounds = array<i64: 1>, scalar_prefetch = 0 : i64, scratch_operands = 1 : i64, tpu.core_type = #tpu.core_type<tc>, window_params = [{transform_indices = @transform_0, window_bounds = array<i64: 4, 128>}, {pipeline_mode = #tpu.pipeline_mode<synchronous>, transform_indices = @transform_1, window_bounds = array<i64: 8, 4>}, {transform_indices = @transform_2, window_bounds = array<i64: 1, 128>}, {pipeline_mode = #tpu.pipeline_mode<synchronous>, transform_indices = @transform_3, window_bounds = array<i64: 8, 1>}]} {
    %c0_i32 = arith.constant 0 : i32
    %0 = arith.cmpi eq, %arg0, %c0_i32 : i32
    %1 = arith.extui %0 : i1 to i32
    %c0_i32_0 = arith.constant 0 : i32
    %2 = arith.cmpi ne, %1, %c0_i32_0 : i32
    scf.if %2 {
      %cst_34 = arith.constant 0xFF800000 : f32
      %89 = vector.broadcast %cst_34 : f32 to vector<8x1xf32>
      %c0_35 = arith.constant 0 : index
      %c0_36 = arith.constant 0 : index
      %90 = vector.load %arg5[%c0_35, %c0_36] : memref<8x1xf32, #tpu.memory_space<vmem>>, vector<8x1xf32>
      tpu.vector_store %arg5[%c0_35, %c0_36], %89 {strides = array<i32>} : memref<8x1xf32, #tpu.memory_space<vmem>>, vector<8x1xf32>,
      %c1073741824_i32_37 = arith.constant 1073741824 : i32
      %91 = vector.broadcast %c1073741824_i32_37 : i32 to vector<8x1xi32>
      %c0_38 = arith.constant 0 : index
      %c0_39 = arith.constant 0 : index
      %92 = vector.load %arg4[%c0_38, %c0_39] : memref<8x1xi32, #tpu.memory_space<vmem>>, vector<8x1xi32>
      tpu.vector_store %arg4[%c0_38, %c0_39], %91 {strides = array<i32>} : memref<8x1xi32, #tpu.memory_space<vmem>>, vector<8x1xi32>,
    } else {
    }
    %c0 = arith.constant 0 : index
    %c0_1 = arith.constant 0 : index
    %3 = vector.load %arg1[%c0, %c0_1] : memref<4x128xf32, #tpu.memory_space<vmem>>, vector<1x128xf32>
    %c1 = arith.constant 1 : index
    %c0_2 = arith.constant 0 : index
    %4 = vector.load %arg1[%c1, %c0_2] : memref<4x128xf32, #tpu.memory_space<vmem>>, vector<1x128xf32>
    %c2 = arith.constant 2 : index
    %c0_3 = arith.constant 0 : index
    %5 = vector.load %arg1[%c2, %c0_3] : memref<4x128xf32, #tpu.memory_space<vmem>>, vector<1x128xf32>
    %c3 = arith.constant 3 : index
    %c0_4 = arith.constant 0 : index
    %6 = vector.load %arg1[%c3, %c0_4] : memref<4x128xf32, #tpu.memory_space<vmem>>, vector<1x128xf32>
    %c0_5 = arith.constant 0 : index
    %c0_6 = arith.constant 0 : index
    %7 = vector.load %arg2[%c0_5, %c0_6] : memref<8x4xf32, #tpu.memory_space<vmem>>, vector<8x1xf32>
    %c0_7 = arith.constant 0 : index
    %c1_8 = arith.constant 1 : index
    %8 = vector.load %arg2[%c0_7, %c1_8] : memref<8x4xf32, #tpu.memory_space<vmem>>, vector<8x1xf32>
    %c0_9 = arith.constant 0 : index
    %c2_10 = arith.constant 2 : index
    %9 = vector.load %arg2[%c0_9, %c2_10] : memref<8x4xf32, #tpu.memory_space<vmem>>, vector<8x1xf32>
    %c0_11 = arith.constant 0 : index
    %c3_12 = arith.constant 3 : index
    %10 = vector.load %arg2[%c0_11, %c3_12] : memref<8x4xf32, #tpu.memory_space<vmem>>, vector<8x1xf32>
    %11 = arith.subf %5, %3 : vector<1x128xf32>
    %12 = arith.subf %6, %4 : vector<1x128xf32>
    %13 = arith.mulf %11, %12 : vector<1x128xf32>
    %14 = arith.subf %9, %7 : vector<8x1xf32>
    %15 = arith.subf %10, %8 : vector<8x1xf32>
    %16 = arith.mulf %14, %15 : vector<8x1xf32>
    %17 = vector.broadcast %5 : vector<1x128xf32> to vector<8x128xf32>
    %18 = vector.broadcast %9 : vector<8x1xf32> to vector<8x128xf32>
    %19 = arith.minimumf %17, %18 : vector<8x128xf32>
    %20 = vector.broadcast %3 : vector<1x128xf32> to vector<8x128xf32>
    %21 = vector.broadcast %7 : vector<8x1xf32> to vector<8x128xf32>
    %22 = arith.maximumf %20, %21 : vector<8x128xf32>
    %23 = arith.subf %19, %22 : vector<8x128xf32>
    %cst = arith.constant 0.000000e+00 : f32
    %24 = vector.broadcast %cst : f32 to vector<8x128xf32>
    %25 = arith.maximumf %23, %24 : vector<8x128xf32>
    %26 = vector.broadcast %6 : vector<1x128xf32> to vector<8x128xf32>
    %27 = vector.broadcast %10 : vector<8x1xf32> to vector<8x128xf32>
    %28 = arith.minimumf %26, %27 : vector<8x128xf32>
    %29 = vector.broadcast %4 : vector<1x128xf32> to vector<8x128xf32>
    %30 = vector.broadcast %8 : vector<8x1xf32> to vector<8x128xf32>
    %31 = arith.maximumf %29, %30 : vector<8x128xf32>
    %32 = arith.subf %28, %31 : vector<8x128xf32>
    %cst_13 = arith.constant 0.000000e+00 : f32
    %33 = vector.broadcast %cst_13 : f32 to vector<8x128xf32>
    %34 = arith.maximumf %32, %33 : vector<8x128xf32>
    %35 = arith.mulf %25, %34 : vector<8x128xf32>
    %36 = vector.broadcast %13 : vector<1x128xf32> to vector<8x128xf32>
    %37 = vector.broadcast %16 : vector<8x1xf32> to vector<8x128xf32>
    %38 = arith.addf %36, %37 : vector<8x128xf32>
    %39 = arith.subf %38, %35 : vector<8x128xf32>
    %40 = arith.divf %35, %39 : vector<8x128xf32>
    %41 = tpu.iota {dimensions = array<i32: 1>} : vector<1x128xi32>
    %c128_i32 = arith.constant 128 : i32
    %42 = arith.muli %arg0, %c128_i32 : i32
    %43 = vector.broadcast %42 : i32 to vector<1x128xi32>
    %44 = arith.addi %41, %43 : vector<1x128xi32>
    %45 = tpu.iota {dimensions = array<i32: 0>} : vector<8x1xi32>
    %c64_i32 = arith.constant 64 : i32
    %46 = vector.broadcast %c64_i32 : i32 to vector<1x128xi32>
    %47 = arith.cmpi slt, %44, %46 : vector<1x128xi32>
    %cst_14 = arith.constant 0xFF800000 : f32
    %48 = vector.shape_cast %47 : vector<1x128xi1> to vector<1x128xi1>
    %49 = vector.broadcast %48 : vector<1x128xi1> to vector<8x128xi1>
    %50 = vector.broadcast %cst_14 : f32 to vector<8x128xf32>
    %51 = arith.select %49, %40, %50 : vector<8x128xi1>, vector<8x128xf32>
    %cst_15 = arith.constant dense<0xFF800000> : vector<128xf32>
    %52 = vector.multi_reduction <maximumf>, %51, %cst_15 [0] : vector<8x128xf32> to vector<128xf32>
    %53 = vector.shape_cast %52 : vector<128xf32> to vector<1x128xf32>
    %54 = vector.broadcast %53 : vector<1x128xf32> to vector<8x128xf32>
    %55 = arith.cmpf oeq, %51, %54 : vector<8x128xf32>
    %c1073741824_i32 = arith.constant 1073741824 : i32
    %56 = vector.shape_cast %45 : vector<8x1xi32> to vector<8x1xi32>
    %57 = vector.broadcast %56 : vector<8x1xi32> to vector<8x128xi32>
    %58 = vector.broadcast %c1073741824_i32 : i32 to vector<8x128xi32>
    %59 = arith.select %55, %57, %58 : vector<8x128xi1>, vector<8x128xi32>
    %cst_16 = arith.constant dense<2147483647> : vector<128xi32>
    %60 = vector.multi_reduction <minsi>, %59, %cst_16 [0] : vector<8x128xi32> to vector<128xi32>
    %61 = vector.shape_cast %60 : vector<128xi32> to vector<1x128xi32>
    %c-2_i32 = arith.constant -2 : i32
    %62 = vector.broadcast %c-2_i32 : i32 to vector<1x128xi32>
    %cst_17 = arith.constant 5.000000e-01 : f32
    %63 = vector.broadcast %cst_17 : f32 to vector<1x128xf32>
    %64 = arith.cmpf ogt, %53, %63 : vector<1x128xf32>
    %65 = arith.select %64, %61, %62 : vector<1x128xi1>, vector<1x128xi32>
    %cst_18 = arith.constant 3.000000e-01 : f32
    %66 = vector.broadcast %cst_18 : f32 to vector<1x128xf32>
    %67 = arith.cmpf olt, %53, %66 : vector<1x128xf32>
    %c-1_i32 = arith.constant -1 : i32
    %68 = vector.broadcast %c-1_i32 : i32 to vector<1x128xi32>
    %69 = arith.select %67, %68, %65 : vector<1x128xi1>, vector<1x128xi32>
    %c0_19 = arith.constant 0 : index
    %c0_20 = arith.constant 0 : index
    %70 = vector.load %arg3[%c0_19, %c0_20] : memref<1x128xi32, #tpu.memory_space<vmem>>, vector<1x128xi32>
    tpu.vector_store %arg3[%c0_19, %c0_20], %69 {strides = array<i32>} : memref<1x128xi32, #tpu.memory_space<vmem>>, vector<1x128xi32>,
    %cst_21 = arith.constant dense<0xFF800000> : vector<8xf32>
    %71 = vector.multi_reduction <maximumf>, %51, %cst_21 [1] : vector<8x128xf32> to vector<8xf32>
    %72 = vector.shape_cast %71 : vector<8xf32> to vector<8x1xf32>
    %73 = vector.broadcast %72 : vector<8x1xf32> to vector<8x128xf32>
    %74 = arith.cmpf oeq, %51, %73 : vector<8x128xf32>
    %c1073741824_i32_22 = arith.constant 1073741824 : i32
    %75 = vector.shape_cast %44 : vector<1x128xi32> to vector<1x128xi32>
    %76 = vector.broadcast %75 : vector<1x128xi32> to vector<8x128xi32>
    %77 = vector.broadcast %c1073741824_i32_22 : i32 to vector<8x128xi32>
    %78 = arith.select %74, %76, %77 : vector<8x128xi1>, vector<8x128xi32>
    %cst_23 = arith.constant dense<2147483647> : vector<8xi32>
    %79 = vector.multi_reduction <minsi>, %78, %cst_23 [1] : vector<8x128xi32> to vector<8xi32>
    %80 = vector.shape_cast %79 : vector<8xi32> to vector<8x1xi32>
    %c0_24 = arith.constant 0 : index
    %c0_25 = arith.constant 0 : index
    %81 = vector.load %arg5[%c0_24, %c0_25] : memref<8x1xf32, #tpu.memory_space<vmem>>, vector<8x1xf32>
    %82 = arith.cmpf ogt, %72, %81 : vector<8x1xf32>
    %c0_26 = arith.constant 0 : index
    %c0_27 = arith.constant 0 : index
    %83 = vector.load %arg5[%c0_26, %c0_27] : memref<8x1xf32, #tpu.memory_space<vmem>>, vector<8x1xf32>
    %84 = arith.select %82, %72, %83 : vector<8x1xi1>, vector<8x1xf32>
    %c0_28 = arith.constant 0 : index
    %c0_29 = arith.constant 0 : index
    %85 = vector.load %arg5[%c0_28, %c0_29] : memref<8x1xf32, #tpu.memory_space<vmem>>, vector<8x1xf32>
    tpu.vector_store %arg5[%c0_28, %c0_29], %84 {strides = array<i32>} : memref<8x1xf32, #tpu.memory_space<vmem>>, vector<8x1xf32>,
    %c0_30 = arith.constant 0 : index
    %c0_31 = arith.constant 0 : index
    %86 = vector.load %arg4[%c0_30, %c0_31] : memref<8x1xi32, #tpu.memory_space<vmem>>, vector<8x1xi32>
    %87 = arith.select %82, %80, %86 : vector<8x1xi1>, vector<8x1xi32>
    %c0_32 = arith.constant 0 : index
    %c0_33 = arith.constant 0 : index
    %88 = vector.load %arg4[%c0_32, %c0_33] : memref<8x1xi32, #tpu.memory_space<vmem>>, vector<8x1xi32>
    tpu.vector_store %arg4[%c0_32, %c0_33], %87 {strides = array<i32>} : memref<8x1xi32, #tpu.memory_space<vmem>>, vector<8x1xi32>,
    return
  }
  func.func @transform_0(%arg0: i32) -> (i32, i32) {
    %c0_i32 = arith.constant 0 : i32
    %c0_i32_0 = arith.constant 0 : i32
    return %c0_i32, %arg0 : i32, i32
  }
  func.func @transform_1(%arg0: i32) -> (i32, i32) {
    %c0_i32 = arith.constant 0 : i32
    %c0_i32_0 = arith.constant 0 : i32
    %c0_i32_1 = arith.constant 0 : i32
    return %c0_i32, %c0_i32_0 : i32, i32
  }
  func.func @transform_2(%arg0: i32) -> (i32, i32) {
    %c0_i32 = arith.constant 0 : i32
    %c0_i32_0 = arith.constant 0 : i32
    return %c0_i32, %arg0 : i32, i32
  }
  func.func @transform_3(%arg0: i32) -> (i32, i32) {
    %c0_i32 = arith.constant 0 : i32
    %c0_i32_0 = arith.constant 0 : i32
    %c0_i32_1 = arith.constant 0 : i32
    return %c0_i32, %c0_i32_0 : i32, i32
  }
}

</mosaic_0001>

<llo_original>
// kernel: tpu_custom_call.1
$region0: #{tpu_custom_call.1}
  #allocation0 [shape = 'u32[]', space=smem, size = 0x4, offset = 0x4, fixed_abs, tag = 'smem constant byte address 0x4 - core index']
  #allocation1 [shape = 'u32[144,128]{1,0:T(1,128)}', space=vmem, size = 0x12000, scoped, tag = 'internal scratch']
  #allocation2 [shape = 'f32[8,1]{1,0:T(8,128)}', space=vmem, size = 0x1000, scoped, tag = 'scratch operand']
  %s0 = inlined_call_operand.vmem [shape: f32[4,128], index: 0, kind: input, shape index: {}]
  %s1 = inlined_call_operand.vmem [shape: f32[8,4], index: 1, kind: input, shape index: {}]
  %s2 = inlined_call_operand.hbm [shape: s32[1,128], index: 2, kind: output, shape index: {0}]
  %s3 = inlined_call_operand.vmem [shape: s32[8,1], index: 3, kind: output, shape index: {1}]
  %4 = xla_tuple %s2, %s3
  %s5 = sld [smem:[#allocation0]]
  $region30: #{tpu_custom_call.1} parent=0
    _
  %s7 = ssub.s32 1, %s5
  %s8 = scalar_select 0, %s7, %s5
  $region1: #{tpu_custom_call.1} parent=0
    #allocation3 [shape = 'u8[512]{0}', space=vmem, size = 0x400, scoped, tag = 'output window, operand 0, single buffered']
    #allocation4 [shape = 's32[1]{0}', space=sflag, size = 0x4, scoped, tag = 'scoped memory for tpu_custom_call.1']
    %9 = vsyncpa [#allocation4], 0
    // Predicated region
    $region2: #{tpu_custom_call.1} parent=1 // pred_check
      _
    $region3: #{tpu_custom_call.1} parent=1 // pred_check_branch
      %11 = sbr.rel (0) target = $region5
    $region4: #{tpu_custom_call.1} parent=1 // pred_region
      _
    $region5: #{tpu_custom_call.1} parent=1 // pred_fallthru
      _
    // Predicated region
    $region6: #{tpu_custom_call.1} parent=1 // pred_check
      _
    $region7: #{tpu_custom_call.1} parent=1 // pred_check_branch
      %13 = sbr.rel (0) target = $region9
    $region8: #{tpu_custom_call.1} parent=1 // pred_region
      _
    $region9: #{tpu_custom_call.1} parent=1 // pred_fallthru
      _
    %p14 = scmp.eq.s32.totalorder 0, 0
    // Predicated region
    $region10: #{tpu_custom_call.1} parent=1 // pred_check
      %p15 = pneg %p14
    $region11: #{tpu_custom_call.1} parent=1 // pred_check_branch
      %17 = sbr.rel (%p15) target = $region13
    $region12: #{tpu_custom_call.1} parent=1 // pred_region
      %vm18 = vcmask 7168
      %19 = vst.msk [vmem:[#allocation2] sm:$0xff] %vm18, -inf
      %20 = vst.msk [vmem:[%s3] sm:$0xff] %vm18, 1073741824
    $region13: #{tpu_custom_call.1} parent=1 // pred_fallthru
      _
    %v21 = vld [vmem:[%s0] sm:$0x1]
    %v22 = vld [vmem:[%s0 + $0x1] sm:$0x1]
    %v23 = vld [vmem:[%s0 + $0x2] sm:$0x1]
    %v24 = vld [vmem:[%s0 + $0x3] sm:$0x1]
    %v25 = vld [vmem:[%s1] sm:$0xff]
    %v26 = vsub.f32 %v23, %v21
    %v27 = vsub.f32 %v24, %v22
    %v28 = vmul.f32 %v26, %v27
    %30 = vrot.lane.b32.xlu0 %v25, 2
    %v31 = vpop.permute.xlu0 %30
    %v33 = vsub.f32 %v25, %v31
    %35 = vrot.lane.b32.xlu0 %v33, 127
    %v36 = vpop.permute.xlu0 %35
    %v38 = vmul.f32 %v33, %v36
    %v39 = vlaneseq
    %v40 = vshrl.u32 %v39, 7
    %v41 = vsub.s32 0, %v40
    %v42 = vrot.slane %v23, %v41
    %43 = vset.pattern.permute.xlu0 2
    %44 = vperm.xlu0 %43, %v25
    %v45 = vpop.permute.xlu0 %44
    %v47 = vmin.f32 %v42, %v45
    %v48 = vlaneseq
    %v49 = vshrl.u32 %v48, 7
    %v50 = vsub.s32 0, %v49
    %v51 = vrot.slane %v21, %v50
    %52 = vset.pattern.permute.xlu0 0
    %53 = vperm.xlu0 %52, %v25
    %v54 = vpop.permute.xlu0 %53
    %v56 = vmax.f32 %v51, %v54
    %v57 = vsub.f32 %v47, %v56
    %v58 = vmax.f32 %v57, 0.0
    %v59 = vlaneseq
    %v60 = vshrl.u32 %v59, 7
    %v61 = vsub.s32 0, %v60
    %v62 = vrot.slane %v24, %v61
    %63 = vset.pattern.permute.xlu0 3
    %64 = vperm.xlu0 %63, %v25
    %v65 = vpop.permute.xlu0 %64
    %v67 = vmin.f32 %v62, %v65
    %v68 = vlaneseq
    %v69 = vshrl.u32 %v68, 7
    %v70 = vsub.s32 0, %v69
    %v71 = vrot.slane %v22, %v70
    %72 = vset.pattern.permute.xlu0 1
    %73 = vperm.xlu0 %72, %v25
    %v74 = vpop.permute.xlu0 %73
    %v76 = vmax.f32 %v71, %v74
    %v77 = vsub.f32 %v67, %v76
    %v78 = vmax.f32 %v77, 0.0
    %v79 = vmul.f32 %v58, %v78
    %v80 = vlaneseq
    %v81 = vshrl.u32 %v80, 7
    %v82 = vsub.s32 0, %v81
    %v83 = vrot.slane %v28, %v82
    %85 = vset.pattern.permute.xlu0 2
    %86 = vperm.xlu0 %85, %v38
    %v87 = vpop.permute.xlu0 %86
    %v89 = vadd.f32 %v83, %v87
    %v90 = vsub.f32 %v89, %v79
    %v91 = vrcp.pop %v90
    %v92 = vmul.f32 %v79, %v91
    %v93 = vlaneseq
    %v94 = vand.u32 %v93, 127
    %s95 = smul.u32 0, 128
    %v96 = vstv %s95
    %v97 = vadd.s32 %v94, %v96
    %v98 = vlaneseq
    %v99 = vshrl.u32 %v98, 7
    %vm100 = vcmp.lt.s32.totalorder %v97, 64
    %v101 = vsel %vm100, 1, 0
    %vm102 = vcmp.eq.s32.totalorder %v101, 1
    %v103 = vsel %vm102, %v92, -inf
    %v104 = vrot.slane %v103, 4
    %v105 = vmax.f32 %v103, %v104
    %v106 = vrot.slane %v105, 2
    %v107 = vmax.f32 %v105, %v106
    %v108 = vrot.slane %v107, 1
    %v109 = vmax.f32 %v107, %v108
    %vm110 = vcmp.eq.f32.partialorder %v103, %v109
    %v111 = vsel %vm110, %v99, 1073741824
    %v112 = vrot.slane %v111, 4
    %vm113 = vcmp.lt.s32.totalorder %v111, %v112
    %v114 = vsel %vm113, %v111, %v112
    %v115 = vrot.slane %v114, 2
    %vm116 = vcmp.lt.s32.totalorder %v114, %v115
    %v117 = vsel %vm116, %v114, %v115
    %v118 = vrot.slane %v117, 1
    %vm119 = vcmp.lt.s32.totalorder %v117, %v118
    %v120 = vsel %vm119, %v117, %v118
    %vm121 = vcmp.gt.f32.partialorder %v109, 0.5
    %v122 = vsel %vm121, %v120, 4294967294
    %vm123 = vcmp.lt.f32.partialorder %v109, 0.3
    %v124 = vsel %vm123, 4294967295, %v122
    %125 = vst [vmem:[#allocation3] sm:$0x1] %v124
    %126 = vmax.xlane.f32.xlu0 %v103
    %v127 = vpop.xlane.xlu0 %126
    %vm128 = vcmp.eq.f32.partialorder %v103, %v127
    %v129 = vsel %vm128, %v97, 1073741824
    %v130 = vand.u32 %v129, 65535
    %v131 = vshra.s32 %v129, 16
    %v132 = vcvt.s32.f32 %v130
    %v133 = vcvt.s32.f32 %v131
    %134 = vmin.xlane.f32.xlu0 %v133
    %v135 = vpop.xlane.xlu0 %134
    %vm136 = vcmp.eq.f32.partialorder %v133, %v135
    %v137 = vsel %vm136, %v132, inf
    %138 = vmin.xlane.f32.xlu0 %v137
    %v139 = vpop.xlane.xlu0 %138
    %v140 = vcvt.f32.s32 %v139
    %v141 = vcvt.f32.s32 %v135
    %v142 = vshll.u32 %v141, 16
    %v143 = vadd.s32 %v142, %v140
    %v144 = vld [vmem:[#allocation2] sm:$0xff]
    %vm145 = vcmp.gt.f32.partialorder %v127, %v144
    %v146 = vsel %vm145, %v127, %v144
    %vm147 = vcmask 7168
    %148 = vst.msk [vmem:[#allocation2] sm:$0xff] %vm147, %v146
    %v149 = vld [vmem:[%s3] sm:$0xff]
    %v150 = vsel %vm145, %v143, %v149
    %151 = vst.msk [vmem:[%s3] sm:$0xff] %vm147, %v150
    // Predicated region
    $region14: #{tpu_custom_call.1} parent=1 // pred_check
      _
    $region15: #{tpu_custom_call.1} parent=1 // pred_check_branch
      %153 = sbr.rel (0) target = $region17
    $region16: #{tpu_custom_call.1} parent=1 // pred_region
      %s155 = ssub.s32 16, 16
      %156 = vsyncadd [#allocation4], %s155
      %s158 = sshll.u32 [#allocation3], 4
      %s159 = int_to_ptr.vmem [resolvable:$true] %s158
      %161 = dma.vmem_to_hbm [thread:$0]  %s159, 16, %s2, [#allocation4]
    $region17: #{tpu_custom_call.1} parent=1 // pred_fallthru
      _
    // Predicated region
    $region18: #{tpu_custom_call.1} parent=1 // pred_check
      _
    $region19: #{tpu_custom_call.1} parent=1 // pred_check_branch
      %163 = sbr.rel (0) target = $region21
    $region20: #{tpu_custom_call.1} parent=1 // pred_region
      _
    $region21: #{tpu_custom_call.1} parent=1 // pred_fallthru
      _
    // Predicated region
    $region22: #{tpu_custom_call.1} parent=1 // pred_check
      _
    $region23: #{tpu_custom_call.1} parent=1 // pred_check_branch
      %165 = sbr.rel (0) target = $region25
    $region24: #{tpu_custom_call.1} parent=1 // pred_region
      %166 = dma.done [#allocation4], 16
    $region25: #{tpu_custom_call.1} parent=1 // pred_fallthru
      _
    // Predicated region
    $region26: #{tpu_custom_call.1} parent=1 // pred_check
      _
    $region27: #{tpu_custom_call.1} parent=1 // pred_check_branch
      %168 = sbr.rel (0) target = $region29
    $region28: #{tpu_custom_call.1} parent=1 // pred_region
      _
    $region29: #{tpu_custom_call.1} parent=1 // pred_fallthru
      _
    %169 = vsyncpa [#allocation4], 1

</llo_original>
